<compile_context>
chip_gen: v6e
topology: v6e:2x2x1
jax: 0.10.0
libtpu: 0.0.40
codegen_flags: <defaults>
</compile_context>

<pallas_src>
import functools

import jax
import jax.numpy as jnp
from jax import lax
from jax.experimental import pallas as pl
from jax.experimental.pallas import tpu as pltpu

EPS = 1e-10


def _gumbel_softmax_kernel(seed_ref, logits_ref, out_ref, *, temperature, hard):
    tm, n_class = logits_ref.shape
    logits = logits_ref[...].astype(jnp.float32)

    # ---- counter-based uniform noise (tiling-invariant, pure jnp/lax ops) ----
    seed = seed_ref[0]
    row = pl.program_id(0) * tm + lax.broadcasted_iota(jnp.int32, (tm, n_class), 0)
    col = lax.broadcasted_iota(jnp.int32, (tm, n_class), 1)
    counter = (row * n_class + col).astype(jnp.uint32)

    # splitmix32-style finalizer, mixed with the seed.
    h = counter + seed.astype(jnp.uint32) * jnp.uint32(0x9E3779B9)
    h = (h ^ (h >> 16)) * jnp.uint32(0x7FEB352D)
    h = (h ^ (h >> 15)) * jnp.uint32(0x846CA68B)
    h = h ^ (h >> 16)

    # Top 24 bits -> Uniform[0, 1) (convert via int32 for a safe sitofp).
    u = (h >> 8).astype(jnp.int32).astype(jnp.float32) * jnp.float32(1.0 / (1 << 24))

    # Gumbel(0,1) noise exactly as in the PyTorch module: -log(eps - log(u + eps))
    gumbel = -jnp.log(EPS - jnp.log(u + EPS))
    z = logits + gumbel
    if temperature != 1.0:  # static: the module hard-codes T=1, so this folds away
        z = z * jnp.float32(1.0 / temperature)

    if hard:
        # One-hot at argmax(z) (== argmax(softmax(z/T))); ties -> lowest index, like torch.max.
        m = jnp.max(z, axis=-1, keepdims=True)
        idx = jnp.min(jnp.where(z == m, col, n_class), axis=-1, keepdims=True)
        y = (col == idx).astype(jnp.float32)
        # TODO(synk): straight-through backward ((y_hard - y_soft).detach() + y_soft) is an
        # autograd concern; only forward values are produced here.
    else:
        # Numerically-stable softmax; normalize with per-row reciprocal + broadcast multiply.
        m = jnp.max(z, axis=-1, keepdims=True)
        e = jnp.exp(z - m)
        inv = jnp.float32(1.0) / jnp.sum(e, axis=-1, keepdims=True)
        y = e * inv

    out_ref[...] = y.astype(out_ref.dtype)


def _round_up(x, m):
    return ((x + m - 1) // m) * m


def gumbel_softmax(logits, seed, *, temperature=1.0, hard=False,
                   target_block_bytes=2 * 1024 * 1024):
    """Gumbel-softmax over the last axis of `logits` ([..., n_class])."""
    orig_shape = logits.shape
    n_class = orig_shape[-1]
    x = logits.reshape(-1, n_class)
    m = x.shape[0]

    itemsize = jnp.dtype(logits.dtype).itemsize
    sublane = max(8, 32 // itemsize)  # 8 for f32, 16 for bf16, 32 for 1-byte dtypes

    # Rows per tile from a per-buffer VMEM byte budget; keep sublane-aligned.
    bytes_per_row = max(n_class * itemsize, 1)
    rows_budget = max(sublane, (target_block_bytes // bytes_per_row) // sublane * sublane)
    tm = min(rows_budget, _round_up(m, sublane))

    # Pad rows so the grid divides evenly; padded rows are computed and sliced off.
    m_pad = _round_up(m, tm)
    if m_pad != m:
        x = jnp.pad(x, ((0, m_pad - m), (0, 0)))
    grid = (m_pad // tm,)

    # Double-buffered input + output tiles; leave headroom, cap <= 48 MiB for v7x's 64 MiB VMEM.
    tile_bytes = tm * n_class * itemsize
    vmem_limit = int(min(max(4 * tile_bytes + (8 << 20), 32 << 20), 48 << 20))

    out = pl.pallas_call(
        functools.partial(_gumbel_softmax_kernel,
                          temperature=float(temperature), hard=bool(hard)),
        out_shape=jax.ShapeDtypeStruct((m_pad, n_class), logits.dtype),
        grid_spec=pltpu.PrefetchScalarGridSpec(
            num_scalar_prefetch=1,
            grid=grid,
            in_specs=[pl.BlockSpec((tm, n_class), lambda i, seed_ref: (i, 0))],
            out_specs=pl.BlockSpec((tm, n_class), lambda i, seed_ref: (i, 0)),
        ),
        compiler_params=pltpu.CompilerParams(
            dimension_semantics=("parallel",),
            vmem_limit_bytes=vmem_limit,
        ),
    )(jnp.asarray([seed], dtype=jnp.int32), x)

    if m_pad != m:
        out = out[:m]
    return out.reshape(orig_shape)


class GumbleSoftmax:
    """JAX/Pallas port of the PyTorch GumbleSoftmax module's forward pass."""

    def __init__(self, hard=False):
        self.hard = hard
        self.training = True

    def __call__(self, logits, seed=0, temp=1, force_hard=False):
        # Mirrors the PyTorch forward: force_hard is overridden to False, temperature is 1.
        force_hard = False
        if self.training and (not force_hard):
            return gumbel_softmax(logits, seed, temperature=1.0, hard=False)
        else:
            return gumbel_softmax(logits, seed, temperature=1.0, hard=True)


if __name__ == "__main__":
    key = jax.random.PRNGKey(0)
    # Small logits tensor; last dim is the class dimension (softmax axis).
    logits = jax.random.normal(key, (2, 4, 16, 16), dtype=jnp.float32)

    module = GumbleSoftmax()

    # Training mode -> soft samples (probability distributions over the last axis).
    module.training = True
    y_soft = jax.block_until_ready(module(logits, seed=123))

    # Eval mode -> hard (one-hot) samples (forward value of the straight-through estimator).
    module.training = False
    y_hard = jax.block_until_ready(module(logits, seed=123))

    assert y_soft.shape == logits.shape and y_hard.shape == logits.shape
    assert bool(jnp.all(jnp.isfinite(y_soft)))
    assert bool(jnp.all((y_soft >= 0.0) & (y_soft <= 1.0)))
    assert bool(jnp.allclose(jnp.sum(y_soft, axis=-1), 1.0, atol=1e-5))
    assert bool(jnp.allclose(jnp.sum(y_hard, axis=-1), 1.0, atol=1e-6))
    assert bool(jnp.all((y_hard == 0.0) | (y_hard == 1.0)))

    print("KERNEL_OK")
</pallas_src>

<mosaic_0001>
module attributes {stable_mosaic.version = 11 : i64} {
  func.func @_gumbel_softmax_kernel(%arg0: i32, %arg1: memref<1xi32, #tpu.memory_space<smem>>, %arg2: memref<128x16xf32, #tpu.memory_space<vmem>>, %arg3: memref<128x16xf32, #tpu.memory_space<vmem>>) attributes {dimension_semantics = [#tpu.dimension_semantics<parallel>], iteration_bounds = array<i64: 1>, scalar_prefetch = 1 : i64, scratch_operands = 0 : i64, tpu.core_type = #tpu.core_type<tc>, window_params = [{transform_indices = @transform_0, window_bounds = array<i64: 128, 16>}, {transform_indices = @transform_1, window_bounds = array<i64: 128, 16>}]} {
    %c0 = arith.constant 0 : index
    %c0_0 = arith.constant 0 : index
    %0 = vector.load %arg2[%c0, %c0_0] : memref<128x16xf32, #tpu.memory_space<vmem>>, vector<128x16xf32>
    %c0_1 = arith.constant 0 : index
    %1 = memref.load %arg1[%c0_1] : memref<1xi32, #tpu.memory_space<smem>>
    %c128_i32 = arith.constant 128 : i32
    %2 = arith.muli %arg0, %c128_i32 : i32
    %3 = tpu.iota {dimensions = array<i32: 0>} : vector<128x16xi32>
    %4 = vector.broadcast %2 : i32 to vector<128x16xi32>
    %5 = arith.addi %4, %3 : vector<128x16xi32>
    %6 = tpu.iota {dimensions = array<i32: 1>} : vector<128x16xi32>
    %c16_i32 = arith.constant 16 : i32
    %7 = vector.broadcast %c16_i32 : i32 to vector<128x16xi32>
    %8 = arith.muli %5, %7 : vector<128x16xi32>
    %9 = arith.addi %8, %6 : vector<128x16xi32>
    %c-1640531527_i32 = arith.constant -1640531527 : i32
    %10 = arith.muli %1, %c-1640531527_i32 : i32
    %11 = vector.broadcast %10 : i32 to vector<128x16xi32>
    %12 = arith.addi %9, %11 : vector<128x16xi32>
    %c16_i32_2 = arith.constant 16 : i32
    %13 = vector.broadcast %c16_i32_2 : i32 to vector<128x16xi32>
    %14 = arith.shrui %12, %13 : vector<128x16xi32>
    %15 = arith.xori %12, %14 : vector<128x16xi32>
    %c2146121005_i32 = arith.constant 2146121005 : i32
    %16 = vector.broadcast %c2146121005_i32 : i32 to vector<128x16xi32>
    %17 = arith.muli %15, %16 : vector<128x16xi32>
    %c15_i32 = arith.constant 15 : i32
    %18 = vector.broadcast %c15_i32 : i32 to vector<128x16xi32>
    %19 = arith.shrui %17, %18 : vector<128x16xi32>
    %20 = arith.xori %17, %19 : vector<128x16xi32>
    %c-2073254261_i32 = arith.constant -2073254261 : i32
    %21 = vector.broadcast %c-2073254261_i32 : i32 to vector<128x16xi32>
    %22 = arith.muli %20, %21 : vector<128x16xi32>
    %c16_i32_3 = arith.constant 16 : i32
    %23 = vector.broadcast %c16_i32_3 : i32 to vector<128x16xi32>
    %24 = arith.shrui %22, %23 : vector<128x16xi32>
    %25 = arith.xori %22, %24 : vector<128x16xi32>
    %c8_i32 = arith.constant 8 : i32
    %26 = vector.broadcast %c8_i32 : i32 to vector<128x16xi32>
    %27 = arith.shrui %25, %26 : vector<128x16xi32>
    %28 = arith.sitofp %27 : vector<128x16xi32> to vector<128x16xf32>
    %cst = arith.constant 5.96046448E-8 : f32
    %29 = vector.broadcast %cst : f32 to vector<128x16xf32>
    %30 = arith.mulf %28, %29 : vector<128x16xf32>
    %cst_4 = arith.constant 1.000000e-10 : f32
    %31 = vector.broadcast %cst_4 : f32 to vector<128x16xf32>
    %32 = arith.addf %30, %31 : vector<128x16xf32>
    %33 = math.log %32 : vector<128x16xf32>
    %cst_5 = arith.constant 1.000000e-10 : f32
    %34 = vector.broadcast %cst_5 : f32 to vector<128x16xf32>
    %35 = arith.subf %34, %33 : vector<128x16xf32>
    %36 = math.log %35 : vector<128x16xf32>
    %cst_6 = arith.constant 0.000000e+00 : f32
    %37 = vector.broadcast %cst_6 : f32 to vector<128x16xf32>
    %38 = arith.subf %37, %36 : vector<128x16xf32>
    %39 = arith.addf %0, %38 : vector<128x16xf32>
    %cst_7 = arith.constant dense<0xFF800000> : vector<128xf32>
    %40 = vector.multi_reduction <maximumf>, %39, %cst_7 [1] : vector<128x16xf32> to vector<128xf32>
    %41 = vector.shape_cast %40 : vector<128xf32> to vector<128x1xf32>
    %42 = vector.broadcast %41 : vector<128x1xf32> to vector<128x16xf32>
    %43 = arith.subf %39, %42 : vector<128x16xf32>
    %44 = math.exp %43 : vector<128x16xf32>
    %cst_8 = arith.constant dense<0.000000e+00> : vector<128xf32>
    %45 = vector.multi_reduction <add>, %44, %cst_8 [1] : vector<128x16xf32> to vector<128xf32>
    %46 = vector.shape_cast %45 : vector<128xf32> to vector<128x1xf32>
    %cst_9 = arith.constant 1.000000e+00 : f32
    %47 = vector.broadcast %cst_9 : f32 to vector<128x1xf32>
    %48 = arith.divf %47, %46 : vector<128x1xf32>
    %49 = vector.broadcast %48 : vector<128x1xf32> to vector<128x16xf32>
    %50 = arith.mulf %44, %49 : vector<128x16xf32>
    %c0_10 = arith.constant 0 : index
    %c0_11 = arith.constant 0 : index
    %51 = vector.load %arg3[%c0_10, %c0_11] : memref<128x16xf32, #tpu.memory_space<vmem>>, vector<128x16xf32>
    tpu.vector_store %arg3[%c0_10, %c0_11], %50 {strides = array<i32>} : memref<128x16xf32, #tpu.memory_space<vmem>>, vector<128x16xf32>,
    return
  }
  func.func @transform_0(%arg0: i32, %arg1: memref<1xi32, #tpu.memory_space<smem>>) -> (i32, i32) {
    %c0_i32 = arith.constant 0 : i32
    %c0_i32_0 = arith.constant 0 : i32
    return %arg0, %c0_i32 : i32, i32
  }
  func.func @transform_1(%arg0: i32, %arg1: memref<1xi32, #tpu.memory_space<smem>>) -> (i32, i32) {
    %c0_i32 = arith.constant 0 : i32
    %c0_i32_0 = arith.constant 0 : i32
    return %arg0, %c0_i32 : i32, i32
  }
}

</mosaic_0001>

<llo_original>
// kernel: tpu_custom_call.1
$region0: #{tpu_custom_call.1}
  #allocation0 [shape = 'u32[]', space=smem, size = 0x4, offset = 0x4, fixed_abs, tag = 'smem constant byte address 0x4 - core index']
  #allocation1 [shape = 'u32[144,128]{1,0:T(1,128)}', space=vmem, size = 0x12000, scoped, tag = 'internal scratch']
  #allocation2 [shape = 's32[1]{0}', space=sflag, size = 0x4, scoped, tag = 'scoped memory for tpu_custom_call.1']
  #allocation3 [shape = 's32[1]{0:T(128)S(6)}', space=smem, size = 0x200, scoped, tag = 'prefetched SMEM operand 0']
  %s0 = inlined_call_operand.<no memory space> [shape: s32[1], index: 0, kind: input, shape index: {}]
  %s1 = inlined_call_operand.vmem [shape: f32[128,16], index: 1, kind: input, shape index: {}]
  %s2 = inlined_call_operand.vmem [shape: f32[128,16], index: 2, kind: output, shape index: {}]
  %s3 = sld [smem:[#allocation0]]
  $region14: #{tpu_custom_call.1} parent=0
    _
  %s5 = ssub.s32 1, %s3
  %s6 = scalar_select 0, %s5, %s3
  %7 = sst [smem:[#allocation3]] %s0
  // Predicated region
  $region2: #{tpu_custom_call.1} parent=0 // pred_check
    _
  $region3: #{tpu_custom_call.1} parent=0 // pred_check_branch
    %9 = sbr.rel (0) target = $region5
  $region4: #{tpu_custom_call.1} parent=0 // pred_region
    _
  $region5: #{tpu_custom_call.1} parent=0 // pred_fallthru
    _
  %v10 = vld [vmem:[%s1] sm:$0xff]
  %v11 = vld [vmem:[%s1 + $0x8] sm:$0xff]
  %v12 = vld [vmem:[%s1 + $0x10] sm:$0xff]
  %v13 = vld [vmem:[%s1 + $0x18] sm:$0xff]
  %v14 = vld [vmem:[%s1 + $0x20] sm:$0xff]
  %v15 = vld [vmem:[%s1 + $0x28] sm:$0xff]
  %v16 = vld [vmem:[%s1 + $0x30] sm:$0xff]
  %v17 = vld [vmem:[%s1 + $0x38] sm:$0xff]
  %v18 = vld [vmem:[%s1 + $0x40] sm:$0xff]
  %v19 = vld [vmem:[%s1 + $0x48] sm:$0xff]
  %v20 = vld [vmem:[%s1 + $0x50] sm:$0xff]
  %v21 = vld [vmem:[%s1 + $0x58] sm:$0xff]
  %v22 = vld [vmem:[%s1 + $0x60] sm:$0xff]
  %v23 = vld [vmem:[%s1 + $0x68] sm:$0xff]
  %v24 = vld [vmem:[%s1 + $0x70] sm:$0xff]
  %v25 = vld [vmem:[%s1 + $0x78] sm:$0xff]
  %s26 = sld [smem:[#allocation3]]
  %s27 = smul.u32 0, 128
  %v28 = vlaneseq
  %v29 = vshrl.u32 %v28, 7
  %v30 = vadd.s32 %v29, 8
  %v31 = vadd.s32 %v29, 16
  %v32 = vadd.s32 %v29, 24
  %v33 = vadd.s32 %v29, 32
  %v34 = vadd.s32 %v29, 40
  %v35 = vadd.s32 %v29, 48
  %v36 = vadd.s32 %v29, 56
  %v37 = vadd.s32 %v29, 64
  %v38 = vadd.s32 %v29, 72
  %v39 = vadd.s32 %v29, 80
  %v40 = vadd.s32 %v29, 88
  %v41 = vadd.s32 %v29, 96
  %v42 = vadd.s32 %v29, 104
  %v43 = vadd.s32 %v29, 112
  %v44 = vadd.s32 %v29, 120
  %v45 = vstv %s27
  %v46 = vadd.s32 %v45, %v29
  %v47 = vadd.s32 %v45, %v30
  %v48 = vadd.s32 %v45, %v31
  %v49 = vadd.s32 %v45, %v32
  %v50 = vadd.s32 %v45, %v33
  %v51 = vadd.s32 %v45, %v34
  %v52 = vadd.s32 %v45, %v35
  %v53 = vadd.s32 %v45, %v36
  %v54 = vadd.s32 %v45, %v37
  %v55 = vadd.s32 %v45, %v38
  %v56 = vadd.s32 %v45, %v39
  %v57 = vadd.s32 %v45, %v40
  %v58 = vadd.s32 %v45, %v41
  %v59 = vadd.s32 %v45, %v42
  %v60 = vadd.s32 %v45, %v43
  %v61 = vadd.s32 %v45, %v44
  %v62 = vlaneseq
  %v63 = vand.u32 %v62, 127
  %v64 = vmul.u32 %v46, 16
  %v65 = vmul.u32 %v47, 16
  %v66 = vmul.u32 %v48, 16
  %v67 = vmul.u32 %v49, 16
  %v68 = vmul.u32 %v50, 16
  %v69 = vmul.u32 %v51, 16
  %v70 = vmul.u32 %v52, 16
  %v71 = vmul.u32 %v53, 16
  %v72 = vmul.u32 %v54, 16
  %v73 = vmul.u32 %v55, 16
  %v74 = vmul.u32 %v56, 16
  %v75 = vmul.u32 %v57, 16
  %v76 = vmul.u32 %v58, 16
  %v77 = vmul.u32 %v59, 16
  %v78 = vmul.u32 %v60, 16
  %v79 = vmul.u32 %v61, 16
  %v80 = vadd.s32 %v64, %v63
  %v81 = vadd.s32 %v65, %v63
  %v82 = vadd.s32 %v66, %v63
  %v83 = vadd.s32 %v67, %v63
  %v84 = vadd.s32 %v68, %v63
  %v85 = vadd.s32 %v69, %v63
  %v86 = vadd.s32 %v70, %v63
  %v87 = vadd.s32 %v71, %v63
  %v88 = vadd.s32 %v72, %v63
  %v89 = vadd.s32 %v73, %v63
  %v90 = vadd.s32 %v74, %v63
  %v91 = vadd.s32 %v75, %v63
  %v92 = vadd.s32 %v76, %v63
  %v93 = vadd.s32 %v77, %v63
  %v94 = vadd.s32 %v78, %v63
  %v95 = vadd.s32 %v79, %v63
  %s96 = smul.u32 %s26, 2654435769
  %v97 = vstv %s96
  %v98 = vadd.s32 %v80, %v97
  %v99 = vadd.s32 %v81, %v97
  %v100 = vadd.s32 %v82, %v97
  %v101 = vadd.s32 %v83, %v97
  %v102 = vadd.s32 %v84, %v97
  %v103 = vadd.s32 %v85, %v97
  %v104 = vadd.s32 %v86, %v97
  %v105 = vadd.s32 %v87, %v97
  %v106 = vadd.s32 %v88, %v97
  %v107 = vadd.s32 %v89, %v97
  %v108 = vadd.s32 %v90, %v97
  %v109 = vadd.s32 %v91, %v97
  %v110 = vadd.s32 %v92, %v97
  %v111 = vadd.s32 %v93, %v97
  %v112 = vadd.s32 %v94, %v97
  %v113 = vadd.s32 %v95, %v97
  %v114 = vshrl.u32 %v98, 16
  %v115 = vshrl.u32 %v99, 16
  %v116 = vshrl.u32 %v100, 16
  %v117 = vshrl.u32 %v101, 16
  %v118 = vshrl.u32 %v102, 16
  %v119 = vshrl.u32 %v103, 16
  %v120 = vshrl.u32 %v104, 16
  %v121 = vshrl.u32 %v105, 16
  %v122 = vshrl.u32 %v106, 16
  %v123 = vshrl.u32 %v107, 16
  %v124 = vshrl.u32 %v108, 16
  %v125 = vshrl.u32 %v109, 16
  %v126 = vshrl.u32 %v110, 16
  %v127 = vshrl.u32 %v111, 16
  %v128 = vshrl.u32 %v112, 16
  %v129 = vshrl.u32 %v113, 16
  %v130 = vxor.u32 %v98, %v114
  %v131 = vxor.u32 %v99, %v115
  %v132 = vxor.u32 %v100, %v116
  %v133 = vxor.u32 %v101, %v117
  %v134 = vxor.u32 %v102, %v118
  %v135 = vxor.u32 %v103, %v119
  %v136 = vxor.u32 %v104, %v120
  %v137 = vxor.u32 %v105, %v121
  %v138 = vxor.u32 %v106, %v122
  %v139 = vxor.u32 %v107, %v123
  %v140 = vxor.u32 %v108, %v124
  %v141 = vxor.u32 %v109, %v125
  %v142 = vxor.u32 %v110, %v126
  %v143 = vxor.u32 %v111, %v127
  %v144 = vxor.u32 %v112, %v128
  %v145 = vxor.u32 %v113, %v129
  %v146 = vmul.u32 %v130, 2146121005
  %v147 = vmul.u32 %v131, 2146121005
  %v148 = vmul.u32 %v132, 2146121005
  %v149 = vmul.u32 %v133, 2146121005
  %v150 = vmul.u32 %v134, 2146121005
  %v151 = vmul.u32 %v135, 2146121005
  %v152 = vmul.u32 %v136, 2146121005
  %v153 = vmul.u32 %v137, 2146121005
  %v154 = vmul.u32 %v138, 2146121005
  %v155 = vmul.u32 %v139, 2146121005
  %v156 = vmul.u32 %v140, 2146121005
  %v157 = vmul.u32 %v141, 2146121005
  %v158 = vmul.u32 %v142, 2146121005
  %v159 = vmul.u32 %v143, 2146121005
  %v160 = vmul.u32 %v144, 2146121005
  %v161 = vmul.u32 %v145, 2146121005
  %v162 = vshrl.u32 %v146, 15
  %v163 = vshrl.u32 %v147, 15
  %v164 = vshrl.u32 %v148, 15
  %v165 = vshrl.u32 %v149, 15
  %v166 = vshrl.u32 %v150, 15
  %v167 = vshrl.u32 %v151, 15
  %v168 = vshrl.u32 %v152, 15
  %v169 = vshrl.u32 %v153, 15
  %v170 = vshrl.u32 %v154, 15
  %v171 = vshrl.u32 %v155, 15
  %v172 = vshrl.u32 %v156, 15
  %v173 = vshrl.u32 %v157, 15
  %v174 = vshrl.u32 %v158, 15
  %v175 = vshrl.u32 %v159, 15
  %v176 = vshrl.u32 %v160, 15
  %v177 = vshrl.u32 %v161, 15
  %v178 = vxor.u32 %v146, %v162
  %v179 = vxor.u32 %v147, %v163
  %v180 = vxor.u32 %v148, %v164
  %v181 = vxor.u32 %v149, %v165
  %v182 = vxor.u32 %v150, %v166
  %v183 = vxor.u32 %v151, %v167
  %v184 = vxor.u32 %v152, %v168
  %v185 = vxor.u32 %v153, %v169
  %v186 = vxor.u32 %v154, %v170
  %v187 = vxor.u32 %v155, %v171
  %v188 = vxor.u32 %v156, %v172
  %v189 = vxor.u32 %v157, %v173
  %v190 = vxor.u32 %v158, %v174
  %v191 = vxor.u32 %v159, %v175
  %v192 = vxor.u32 %v160, %v176
  %v193 = vxor.u32 %v161, %v177
  %v194 = vmul.u32 %v178, 2221713035
  %v195 = vmul.u32 %v179, 2221713035
  %v196 = vmul.u32 %v180, 2221713035
  %v197 = vmul.u32 %v181, 2221713035
  %v198 = vmul.u32 %v182, 2221713035
  %v199 = vmul.u32 %v183, 2221713035
  %v200 = vmul.u32 %v184, 2221713035
  %v201 = vmul.u32 %v185, 2221713035
  %v202 = vmul.u32 %v186, 2221713035
  %v203 = vmul.u32 %v187, 2221713035
  %v204 = vmul.u32 %v188, 2221713035
  %v205 = vmul.u32 %v189, 2221713035
  %v206 = vmul.u32 %v190, 2221713035
  %v207 = vmul.u32 %v191, 2221713035
  %v208 = vmul.u32 %v192, 2221713035
  %v209 = vmul.u32 %v193, 2221713035
  %v210 = vshrl.u32 %v194, 16
  %v211 = vshrl.u32 %v195, 16
  %v212 = vshrl.u32 %v196, 16
  %v213 = vshrl.u32 %v197, 16
  %v214 = vshrl.u32 %v198, 16
  %v215 = vshrl.u32 %v199, 16
  %v216 = vshrl.u32 %v200, 16
  %v217 = vshrl.u32 %v201, 16
  %v218 = vshrl.u32 %v202, 16
  %v219 = vshrl.u32 %v203, 16
  %v220 = vshrl.u32 %v204, 16
  %v221 = vshrl.u32 %v205, 16
  %v222 = vshrl.u32 %v206, 16
  %v223 = vshrl.u32 %v207, 16
  %v224 = vshrl.u32 %v208, 16
  %v225 = vshrl.u32 %v209, 16
  %v226 = vxor.u32 %v194, %v210
  %v227 = vxor.u32 %v195, %v211
  %v228 = vxor.u32 %v196, %v212
  %v229 = vxor.u32 %v197, %v213
  %v230 = vxor.u32 %v198, %v214
  %v231 = vxor.u32 %v199, %v215
  %v232 = vxor.u32 %v200, %v216
  %v233 = vxor.u32 %v201, %v217
  %v234 = vxor.u32 %v202, %v218
  %v235 = vxor.u32 %v203, %v219
  %v236 = vxor.u32 %v204, %v220
  %v237 = vxor.u32 %v205, %v221
  %v238 = vxor.u32 %v206, %v222
  %v239 = vxor.u32 %v207, %v223
  %v240 = vxor.u32 %v208, %v224
  %v241 = vxor.u32 %v209, %v225
  %v242 = vshrl.u32 %v226, 8
  %v243 = vshrl.u32 %v227, 8
  %v244 = vshrl.u32 %v228, 8
  %v245 = vshrl.u32 %v229, 8
  %v246 = vshrl.u32 %v230, 8
  %v247 = vshrl.u32 %v231, 8
  %v248 = vshrl.u32 %v232, 8
  %v249 = vshrl.u32 %v233, 8
  %v250 = vshrl.u32 %v234, 8
  %v251 = vshrl.u32 %v235, 8
  %v252 = vshrl.u32 %v236, 8
  %v253 = vshrl.u32 %v237, 8
  %v254 = vshrl.u32 %v238, 8
  %v255 = vshrl.u32 %v239, 8
  %v256 = vshrl.u32 %v240, 8
  %v257 = vshrl.u32 %v241, 8
  %v258 = vcvt.s32.f32 %v242
  %v259 = vcvt.s32.f32 %v243
  %v260 = vcvt.s32.f32 %v244
  %v261 = vcvt.s32.f32 %v245
  %v262 = vcvt.s32.f32 %v246
  %v263 = vcvt.s32.f32 %v247
  %v264 = vcvt.s32.f32 %v248
  %v265 = vcvt.s32.f32 %v249
  %v266 = vcvt.s32.f32 %v250
  %v267 = vcvt.s32.f32 %v251
  %v268 = vcvt.s32.f32 %v252
  %v269 = vcvt.s32.f32 %v253
  %v270 = vcvt.s32.f32 %v254
  %v271 = vcvt.s32.f32 %v255
  %v272 = vcvt.s32.f32 %v256
  %v273 = vcvt.s32.f32 %v257
  %v274 = vmul.f32 %v258, 5.9604645e-08
  %v275 = vmul.f32 %v259, 5.9604645e-08
  %v276 = vmul.f32 %v260, 5.9604645e-08
  %v277 = vmul.f32 %v261, 5.9604645e-08
  %v278 = vmul.f32 %v262, 5.9604645e-08
  %v279 = vmul.f32 %v263, 5.9604645e-08
  %v280 = vmul.f32 %v264, 5.9604645e-08
  %v281 = vmul.f32 %v265, 5.9604645e-08
  %v282 = vmul.f32 %v266, 5.9604645e-08
  %v283 = vmul.f32 %v267, 5.9604645e-08
  %v284 = vmul.f32 %v268, 5.9604645e-08
  %v285 = vmul.f32 %v269, 5.9604645e-08
  %v286 = vmul.f32 %v270, 5.9604645e-08
  %v287 = vmul.f32 %v271, 5.9604645e-08
  %v288 = vmul.f32 %v272, 5.9604645e-08
  %v289 = vmul.f32 %v273, 5.9604645e-08
  %v290 = vadd.f32 %v274, 1e-10
  %v291 = vadd.f32 %v275, 1e-10
  %v292 = vadd.f32 %v276, 1e-10
  %v293 = vadd.f32 %v277, 1e-10
  %v294 = vadd.f32 %v278, 1e-10
  %v295 = vadd.f32 %v279, 1e-10
  %v296 = vadd.f32 %v280, 1e-10
  %v297 = vadd.f32 %v281, 1e-10
  %v298 = vadd.f32 %v282, 1e-10
  %v299 = vadd.f32 %v283, 1e-10
  %v300 = vadd.f32 %v284, 1e-10
  %v301 = vadd.f32 %v285, 1e-10
  %v302 = vadd.f32 %v286, 1e-10
  %v303 = vadd.f32 %v287, 1e-10
  %v304 = vadd.f32 %v288, 1e-10
  %v305 = vadd.f32 %v289, 1e-10
  %v306 = vlog2.pop %v290
  %v307 = vmul.f32 %v306, 0.6931472
  %v308 = vlog2.pop %v291
  %v309 = vmul.f32 %v308, 0.6931472
  %v310 = vlog2.pop %v292
  %v311 = vmul.f32 %v310, 0.6931472
  %v312 = vlog2.pop %v293
  %v313 = vmul.f32 %v312, 0.6931472
  %v314 = vlog2.pop %v294
  %v315 = vmul.f32 %v314, 0.6931472
  %v316 = vlog2.pop %v295
  %v317 = vmul.f32 %v316, 0.6931472
  %v318 = vlog2.pop %v296
  %v319 = vmul.f32 %v318, 0.6931472
  %v320 = vlog2.pop %v297
  %v321 = vmul.f32 %v320, 0.6931472
  %v322 = vlog2.pop %v298
  %v323 = vmul.f32 %v322, 0.6931472
  %v324 = vlog2.pop %v299
  %v325 = vmul.f32 %v324, 0.6931472
  %v326 = vlog2.pop %v300
  %v327 = vmul.f32 %v326, 0.6931472
  %v328 = vlog2.pop %v301
  %v329 = vmul.f32 %v328, 0.6931472
  %v330 = vlog2.pop %v302
  %v331 = vmul.f32 %v330, 0.6931472
  %v332 = vlog2.pop %v303
  %v333 = vmul.f32 %v332, 0.6931472
  %v334 = vlog2.pop %v304
  %v335 = vmul.f32 %v334, 0.6931472
  %v336 = vlog2.pop %v305
  %v337 = vmul.f32 %v336, 0.6931472
  %v338 = vsub.f32 1e-10, %v307
  %v339 = vsub.f32 1e-10, %v309
  %v340 = vsub.f32 1e-10, %v311
  %v341 = vsub.f32 1e-10, %v313
  %v342 = vsub.f32 1e-10, %v315
  %v343 = vsub.f32 1e-10, %v317
  %v344 = vsub.f32 1e-10, %v319
  %v345 = vsub.f32 1e-10, %v321
  %v346 = vsub.f32 1e-10, %v323
  %v347 = vsub.f32 1e-10, %v325
  %v348 = vsub.f32 1e-10, %v327
  %v349 = vsub.f32 1e-10, %v329
  %v350 = vsub.f32 1e-10, %v331
  %v351 = vsub.f32 1e-10, %v333
  %v352 = vsub.f32 1e-10, %v335
  %v353 = vsub.f32 1e-10, %v337
  %v354 = vlog2.pop %v338
  %v355 = vmul.f32 %v354, 0.6931472
  %v356 = vlog2.pop %v339
  %v357 = vmul.f32 %v356, 0.6931472
  %v358 = vlog2.pop %v340
  %v359 = vmul.f32 %v358, 0.6931472
  %v360 = vlog2.pop %v341
  %v361 = vmul.f32 %v360, 0.6931472
  %v362 = vlog2.pop %v342
  %v363 = vmul.f32 %v362, 0.6931472
  %v364 = vlog2.pop %v343
  %v365 = vmul.f32 %v364, 0.6931472
  %v366 = vlog2.pop %v344
  %v367 = vmul.f32 %v366, 0.6931472
  %v368 = vlog2.pop %v345
  %v369 = vmul.f32 %v368, 0.6931472
  %v370 = vlog2.pop %v346
  %v371 = vmul.f32 %v370, 0.6931472
  %v372 = vlog2.pop %v347
  %v373 = vmul.f32 %v372, 0.6931472
  %v374 = vlog2.pop %v348
  %v375 = vmul.f32 %v374, 0.6931472
  %v376 = vlog2.pop %v349
  %v377 = vmul.f32 %v376, 0.6931472
  %v378 = vlog2.pop %v350
  %v379 = vmul.f32 %v378, 0.6931472
  %v380 = vlog2.pop %v351
  %v381 = vmul.f32 %v380, 0.6931472
  %v382 = vlog2.pop %v352
  %v383 = vmul.f32 %v382, 0.6931472
  %v384 = vlog2.pop %v353
  %v385 = vmul.f32 %v384, 0.6931472
  %v386 = vsub.f32 0.0, %v355
  %v387 = vsub.f32 0.0, %v357
  %v388 = vsub.f32 0.0, %v359
  %v389 = vsub.f32 0.0, %v361
  %v390 = vsub.f32 0.0, %v363
  %v391 = vsub.f32 0.0, %v365
  %v392 = vsub.f32 0.0, %v367
  %v393 = vsub.f32 0.0, %v369
  %v394 = vsub.f32 0.0, %v371
  %v395 = vsub.f32 0.0, %v373
  %v396 = vsub.f32 0.0, %v375
  %v397 = vsub.f32 0.0, %v377
  %v398 = vsub.f32 0.0, %v379
  %v399 = vsub.f32 0.0, %v381
  %v400 = vsub.f32 0.0, %v383
  %v401 = vsub.f32 0.0, %v385
  %v402 = vadd.f32 %v10, %v386
  %v403 = vadd.f32 %v11, %v387
  %v404 = vadd.f32 %v12, %v388
  %v405 = vadd.f32 %v13, %v389
  %v406 = vadd.f32 %v14, %v390
  %v407 = vadd.f32 %v15, %v391
  %v408 = vadd.f32 %v16, %v392
  %v409 = vadd.f32 %v17, %v393
  %v410 = vadd.f32 %v18, %v394
  %v411 = vadd.f32 %v19, %v395
  %v412 = vadd.f32 %v20, %v396
  %v413 = vadd.f32 %v21, %v397
  %v414 = vadd.f32 %v22, %v398
  %v415 = vadd.f32 %v23, %v399
  %v416 = vadd.f32 %v24, %v400
  %v417 = vadd.f32 %v25, %v401
  %vm418 = vcmask 130048
  %v419 = vsel %vm418, %v402, -inf
  %420 = vmax.xlane.f32.xlu0 %v419
  %v421 = vpop.xlane.xlu0 %420
  %v422 = vsel %vm418, %v403, -inf
  %423 = vmax.xlane.f32.xlu0 %v422
  %v424 = vpop.xlane.xlu0 %423
  %v425 = vsel %vm418, %v404, -inf
  %426 = vmax.xlane.f32.xlu0 %v425
  %v427 = vpop.xlane.xlu0 %426
  %v428 = vsel %vm418, %v405, -inf
  %429 = vmax.xlane.f32.xlu0 %v428
  %v430 = vpop.xlane.xlu0 %429
  %v431 = vsel %vm418, %v406, -inf
  %432 = vmax.xlane.f32.xlu0 %v431
  %v433 = vpop.xlane.xlu0 %432
  %v434 = vsel %vm418, %v407, -inf
  %435 = vmax.xlane.f32.xlu0 %v434
  %v436 = vpop.xlane.xlu0 %435
  %v437 = vsel %vm418, %v408, -inf
  %438 = vmax.xlane.f32.xlu0 %v437
  %v439 = vpop.xlane.xlu0 %438
  %v440 = vsel %vm418, %v409, -inf
  %441 = vmax.xlane.f32.xlu0 %v440
  %v442 = vpop.xlane.xlu0 %441
  %v443 = vsel %vm418, %v410, -inf
  %444 = vmax.xlane.f32.xlu0 %v443
  %v445 = vpop.xlane.xlu0 %444
  %v446 = vsel %vm418, %v411, -inf
  %447 = vmax.xlane.f32.xlu0 %v446
  %v448 = vpop.xlane.xlu0 %447
  %v449 = vsel %vm418, %v412, -inf
  %450 = vmax.xlane.f32.xlu0 %v449
  %v451 = vpop.xlane.xlu0 %450
  %v452 = vsel %vm418, %v413, -inf
  %453 = vmax.xlane.f32.xlu0 %v452
  %v454 = vpop.xlane.xlu0 %453
  %v455 = vsel %vm418, %v414, -inf
  %456 = vmax.xlane.f32.xlu0 %v455
  %v457 = vpop.xlane.xlu0 %456
  %v458 = vsel %vm418, %v415, -inf
  %459 = vmax.xlane.f32.xlu0 %v458
  %v460 = vpop.xlane.xlu0 %459
  %v461 = vsel %vm418, %v416, -inf
  %462 = vmax.xlane.f32.xlu0 %v461
  %v463 = vpop.xlane.xlu0 %462
  %v464 = vsel %vm418, %v417, -inf
  %465 = vmax.xlane.f32.xlu0 %v464
  %v466 = vpop.xlane.xlu0 %465
  %v467 = vsub.f32 %v402, %v421
  %v468 = vsub.f32 %v403, %v424
  %v469 = vsub.f32 %v404, %v427
  %v470 = vsub.f32 %v405, %v430
  %v471 = vsub.f32 %v406, %v433
  %v472 = vsub.f32 %v407, %v436
  %v473 = vsub.f32 %v408, %v439
  %v474 = vsub.f32 %v409, %v442
  %v475 = vsub.f32 %v410, %v445
  %v476 = vsub.f32 %v411, %v448
  %v477 = vsub.f32 %v412, %v451
  %v478 = vsub.f32 %v413, %v454
  %v479 = vsub.f32 %v414, %v457
  %v480 = vsub.f32 %v415, %v460
  %v481 = vsub.f32 %v416, %v463
  %v482 = vsub.f32 %v417, %v466
  %v483 = vmul.f32 %v467, 1.442695
  %v484 = vpow.pop %v483
  %v485 = vmul.f32 %v468, 1.442695
  %v486 = vpow.pop %v485
  %v487 = vmul.f32 %v469, 1.442695
  %v488 = vpow.pop %v487
  %v489 = vmul.f32 %v470, 1.442695
  %v490 = vpow.pop %v489
  %v491 = vmul.f32 %v471, 1.442695
  %v492 = vpow.pop %v491
  %v493 = vmul.f32 %v472, 1.442695
  %v494 = vpow.pop %v493
  %v495 = vmul.f32 %v473, 1.442695
  %v496 = vpow.pop %v495
  %v497 = vmul.f32 %v474, 1.442695
  %v498 = vpow.pop %v497
  %v499 = vmul.f32 %v475, 1.442695
  %v500 = vpow.pop %v499
  %v501 = vmul.f32 %v476, 1.442695
  %v502 = vpow.pop %v501
  %v503 = vmul.f32 %v477, 1.442695
  %v504 = vpow.pop %v503
  %v505 = vmul.f32 %v478, 1.442695
  %v506 = vpow.pop %v505
  %v507 = vmul.f32 %v479, 1.442695
  %v508 = vpow.pop %v507
  %v509 = vmul.f32 %v480, 1.442695
  %v510 = vpow.pop %v509
  %v511 = vmul.f32 %v481, 1.442695
  %v512 = vpow.pop %v511
  %v513 = vmul.f32 %v482, 1.442695
  %v514 = vpow.pop %v513
  %v515 = vsel %vm418, %v484, 0.0
  %516 = vadd.xlane.f32.xlu0 %v515
  %v517 = vpop.xlane.xlu0 %516
  %v518 = vsel %vm418, %v486, 0.0
  %519 = vadd.xlane.f32.xlu0 %v518
  %v520 = vpop.xlane.xlu0 %519
  %v521 = vsel %vm418, %v488, 0.0
  %522 = vadd.xlane.f32.xlu0 %v521
  %v523 = vpop.xlane.xlu0 %522
  %v524 = vsel %vm418, %v490, 0.0
  %525 = vadd.xlane.f32.xlu0 %v524
  %v526 = vpop.xlane.xlu0 %525
  %v527 = vsel %vm418, %v492, 0.0
  %528 = vadd.xlane.f32.xlu0 %v527
  %v529 = vpop.xlane.xlu0 %528
  %v530 = vsel %vm418, %v494, 0.0
  %531 = vadd.xlane.f32.xlu0 %v530
  %v532 = vpop.xlane.xlu0 %531
  %v533 = vsel %vm418, %v496, 0.0
  %534 = vadd.xlane.f32.xlu0 %v533
  %v535 = vpop.xlane.xlu0 %534
  %v536 = vsel %vm418, %v498, 0.0
  %537 = vadd.xlane.f32.xlu0 %v536
  %v538 = vpop.xlane.xlu0 %537
  %v539 = vsel %vm418, %v500, 0.0
  %540 = vadd.xlane.f32.xlu0 %v539
  %v541 = vpop.xlane.xlu0 %540
  %v542 = vsel %vm418, %v502, 0.0
  %543 = vadd.xlane.f32.xlu0 %v542
  %v544 = vpop.xlane.xlu0 %543
  %v545 = vsel %vm418, %v504, 0.0
  %546 = vadd.xlane.f32.xlu0 %v545
  %v547 = vpop.xlane.xlu0 %546
  %v548 = vsel %vm418, %v506, 0.0
  %549 = vadd.xlane.f32.xlu0 %v548
  %v550 = vpop.xlane.xlu0 %549
  %v551 = vsel %vm418, %v508, 0.0
  %552 = vadd.xlane.f32.xlu0 %v551
  %v553 = vpop.xlane.xlu0 %552
  %v554 = vsel %vm418, %v510, 0.0
  %555 = vadd.xlane.f32.xlu0 %v554
  %v556 = vpop.xlane.xlu0 %555
  %v557 = vsel %vm418, %v512, 0.0
  %558 = vadd.xlane.f32.xlu0 %v557
  %v559 = vpop.xlane.xlu0 %558
  %v560 = vsel %vm418, %v514, 0.0
  %561 = vadd.xlane.f32.xlu0 %v560
  %v562 = vpop.xlane.xlu0 %561
  %v563 = vrcp.pop %v517
  %v564 = vmul.f32 1.0, %v563
  %v565 = vrcp.pop %v520
  %v566 = vmul.f32 1.0, %v565
  %v567 = vrcp.pop %v523
  %v568 = vmul.f32 1.0, %v567
  %v569 = vrcp.pop %v526
  %v570 = vmul.f32 1.0, %v569
  %v571 = vrcp.pop %v529
  %v572 = vmul.f32 1.0, %v571
  %v573 = vrcp.pop %v532
  %v574 = vmul.f32 1.0, %v573
  %v575 = vrcp.pop %v535
  %v576 = vmul.f32 1.0, %v575
  %v577 = vrcp.pop %v538
  %v578 = vmul.f32 1.0, %v577
  %v579 = vrcp.pop %v541
  %v580 = vmul.f32 1.0, %v579
  %v581 = vrcp.pop %v544
  %v582 = vmul.f32 1.0, %v581
  %v583 = vrcp.pop %v547
  %v584 = vmul.f32 1.0, %v583
  %v585 = vrcp.pop %v550
  %v586 = vmul.f32 1.0, %v585
  %v587 = vrcp.pop %v553
  %v588 = vmul.f32 1.0, %v587
  %v589 = vrcp.pop %v556
  %v590 = vmul.f32 1.0, %v589
  %v591 = vrcp.pop %v559
  %v592 = vmul.f32 1.0, %v591
  %v593 = vrcp.pop %v562
  %v594 = vmul.f32 1.0, %v593
  %v595 = vmul.f32 %v484, %v564
  %v596 = vmul.f32 %v486, %v566
  %v597 = vmul.f32 %v488, %v568
  %v598 = vmul.f32 %v490, %v570
  %v599 = vmul.f32 %v492, %v572
  %v600 = vmul.f32 %v494, %v574
  %v601 = vmul.f32 %v496, %v576
  %v602 = vmul.f32 %v498, %v578
  %v603 = vmul.f32 %v500, %v580
  %v604 = vmul.f32 %v502, %v582
  %v605 = vmul.f32 %v504, %v584
  %v606 = vmul.f32 %v506, %v586
  %v607 = vmul.f32 %v508, %v588
  %v608 = vmul.f32 %v510, %v590
  %v609 = vmul.f32 %v512, %v592
  %v610 = vmul.f32 %v514, %v594
  %611 = vst.msk [vmem:[%s2] sm:$0xff] %vm418, %v595
  %612 = vst.msk [vmem:[%s2 + $0x8] sm:$0xff] %vm418, %v596
  %613 = vst.msk [vmem:[%s2 + $0x10] sm:$0xff] %vm418, %v597
  %614 = vst.msk [vmem:[%s2 + $0x18] sm:$0xff] %vm418, %v598
  %615 = vst.msk [vmem:[%s2 + $0x20] sm:$0xff] %vm418, %v599
  %616 = vst.msk [vmem:[%s2 + $0x28] sm:$0xff] %vm418, %v600
  %617 = vst.msk [vmem:[%s2 + $0x30] sm:$0xff] %vm418, %v601
  %618 = vst.msk [vmem:[%s2 + $0x38] sm:$0xff] %vm418, %v602
  %619 = vst.msk [vmem:[%s2 + $0x40] sm:$0xff] %vm418, %v603
  %620 = vst.msk [vmem:[%s2 + $0x48] sm:$0xff] %vm418, %v604
  %621 = vst.msk [vmem:[%s2 + $0x50] sm:$0xff] %vm418, %v605
  %622 = vst.msk [vmem:[%s2 + $0x58] sm:$0xff] %vm418, %v606
  %623 = vst.msk [vmem:[%s2 + $0x60] sm:$0xff] %vm418, %v607
  %624 = vst.msk [vmem:[%s2 + $0x68] sm:$0xff] %vm418, %v608
  %625 = vst.msk [vmem:[%s2 + $0x70] sm:$0xff] %vm418, %v609
  %626 = vst.msk [vmem:[%s2 + $0x78] sm:$0xff] %vm418, %v610
  // Predicated region
  $region6: #{tpu_custom_call.1} parent=0 // pred_check
    _
  $region7: #{tpu_custom_call.1} parent=0 // pred_check_branch
    %628 = sbr.rel (0) target = $region9
  $region8: #{tpu_custom_call.1} parent=0 // pred_region
    _
  $region9: #{tpu_custom_call.1} parent=0 // pred_fallthru
    _
  // Predicated region
  $region10: #{tpu_custom_call.1} parent=0 // pred_check
    _
  $region11: #{tpu_custom_call.1} parent=0 // pred_check_branch
    %630 = sbr.rel (0) target = $region13
  $region12: #{tpu_custom_call.1} parent=0 // pred_region
    _
  $region13: #{tpu_custom_call.1} parent=0 // pred_fallthru
    _

</llo_original>
